<compile_context>
chip_gen: v7x
topology: tpu7x:2x2x1
jax: 0.10.0
libtpu: 0.0.40
codegen_flags: <defaults>
</compile_context>

<pallas_src>
import numpy as np

import jax
import jax.numpy as jnp
from jax import lax
from jax.experimental import pallas as pl
from jax.experimental.pallas import tpu as pltpu

EPS = 1e-5


# ----------------------------- Pallas kernel --------------------------------
def dense_layer_kernel(x_ref, s1_ref, b1_ref, w1_ref, b2_ref, w2_ref, out_ref):
    """One image per grid step; everything in lane-dense (H, W*C) row layout.

    x_ref  : (H, W*Cin)            packed NHWC input rows
    s1/b1  : (1, W*Cin)            folded BN1 scale/bias, tiled per pixel
    w1_ref : (W*Cin, W*Cmid)       block-diagonal 1x1-conv weight (BN2 scale folded)
    b2_ref : (1, W*Cmid)           folded BN2 bias, tiled per pixel
    w2_ref : (3*W*Cmid, W*Cg)      banded 3x3-conv weight (horiz. taps + padding)
    out_ref: (H, W*Cg)             packed new features (lane-dense store)
    """
    H = x_ref.shape[0]

    # BN1 (folded affine) + ReLU -- pure VPU on the lane-dense row layout.
    t = jnp.maximum(x_ref[...] * s1_ref[...] + b1_ref[...], 0.0)

    # 1x1 conv (+ folded BN2 scale) as one block-diagonal MXU matmul that keeps
    # the row layout: (H, W*Cin) @ (W*Cin, W*Cmid) -> (H, W*Cmid).
    y = jnp.dot(t, w1_ref[...], preferred_element_type=jnp.float32)
    y = jnp.maximum(y + b2_ref[...], 0.0)

    # Vertical 3x3 taps: neighbour rows via sublane rolls + edge masks.
    row = lax.broadcasted_iota(jnp.int32, y.shape, 0)
    y_up = jnp.where(row > 0, pltpu.roll(y, 1, axis=0), 0.0)          # y[h-1]
    y_dn = jnp.where(row < H - 1, pltpu.roll(y, H - 1, axis=0), 0.0)  # y[h+1]
    y3 = jnp.concatenate([y_up, y, y_dn], axis=1)                     # (H, 3*W*Cmid)

    # Entire 3x3 conv (all 9 taps; horizontal shifts + zero padding baked into
    # the banded weight matrix) in a SINGLE MXU call; the result is already in
    # the lane-dense (H, W*Cg) output layout -> unmasked stores.
    out = jnp.dot(y3, w2_ref[...], preferred_element_type=jnp.float32)

    # TODO(synk): train-mode Dropout would use pltpu.prng_seed/prng_random_bits;
    # nn.Dropout is the identity in eval mode (and absent for dropout=0).
    out_ref[...] = out.astype(out_ref.dtype)


# ------------------------------- wrappers ------------------------------------
def dense_layer_forward_nhwc(x_nhwc, params):
    """NHWC in -> NHWC out (concat along channel axis). No transposes."""
    s1t, b1t, w1blk, b2t, w2big = params
    N, H, W, Cin = x_nhwc.shape
    Cmid = w1blk.shape[1] // W
    Cg = w2big.shape[1] // W

    x_packed = x_nhwc.reshape(N, H, W * Cin)  # lane-dense input slab

    new_packed = pl.pallas_call(
        dense_layer_kernel,
        out_shape=jax.ShapeDtypeStruct((N, H, W * Cg), x_nhwc.dtype),
        grid=(N,),
        in_specs=[
            pl.BlockSpec((None, H, W * Cin), lambda n: (n, 0, 0)),
            pl.BlockSpec((1, W * Cin), lambda n: (0, 0)),
            pl.BlockSpec((1, W * Cin), lambda n: (0, 0)),
            pl.BlockSpec((W * Cin, W * Cmid), lambda n: (0, 0)),
            pl.BlockSpec((1, W * Cmid), lambda n: (0, 0)),
            pl.BlockSpec((3 * W * Cmid, W * Cg), lambda n: (0, 0)),
        ],
        out_specs=pl.BlockSpec((None, H, W * Cg), lambda n: (n, 0, 0)),
        compiler_params=pltpu.CompilerParams(
            dimension_semantics=("parallel",)),
    )(x_packed, s1t, b1t, w1blk, b2t, w2big)

    new_nhwc = new_packed.reshape(N, H, W, Cg)
    return jnp.concatenate([x_nhwc, new_nhwc], axis=-1)


def dense_layer_forward(x_nchw, params):
    """NCHW compatibility wrapper to match the PyTorch module exactly."""
    x_nhwc = jnp.transpose(x_nchw, (0, 2, 3, 1))
    out_nhwc = dense_layer_forward_nhwc(x_nhwc, params)
    return jnp.transpose(out_nhwc, (0, 3, 1, 2))


# ------------------------- parameter construction ---------------------------
def make_params(key, in_channel, growth_rate, bn_size, W):
    """Random module params + host-side packing into the kernel's layouts."""
    cmid = bn_size * growth_rate
    cg = growth_rate
    ks = jax.random.split(key, 10)

    # BatchNorm params / running stats (eval-mode semantics)
    g1 = 1.0 + 0.1 * jax.random.normal(ks[0], (in_channel,), jnp.float32)
    be1 = 0.1 * jax.random.normal(ks[1], (in_channel,), jnp.float32)
    m1 = 0.1 * jax.random.normal(ks[2], (in_channel,), jnp.float32)
    v1 = 1.0 + 0.1 * jax.random.uniform(ks[3], (in_channel,), jnp.float32)
    g2 = 1.0 + 0.1 * jax.random.normal(ks[4], (cmid,), jnp.float32)
    be2 = 0.1 * jax.random.normal(ks[5], (cmid,), jnp.float32)
    m2 = 0.1 * jax.random.normal(ks[6], (cmid,), jnp.float32)
    v2 = 1.0 + 0.1 * jax.random.uniform(ks[7], (cmid,), jnp.float32)
    # Conv weights in PyTorch OIHW layout
    w1_oihw = (jax.random.normal(ks[8], (cmid, in_channel, 1, 1), jnp.float32)
               / jnp.sqrt(in_channel))
    w2_oihw = (jax.random.normal(ks[9], (cg, cmid, 3, 3), jnp.float32)
               / jnp.sqrt(9.0 * cmid))
    raw = dict(g1=g1, be1=be1, m1=m1, v1=v1, g2=g2, be2=be2, m2=m2, v2=v2,
               w1=w1_oihw, w2=w2_oihw)

    # ---- host-side folding + packing (done once, numpy) ----
    s1 = (np.asarray(g1) / np.sqrt(np.asarray(v1) + EPS)).astype(np.float32)
    b1 = (np.asarray(be1) - np.asarray(m1) * s1).astype(np.float32)
    s2 = (np.asarray(g2) / np.sqrt(np.asarray(v2) + EPS)).astype(np.float32)
    b2 = (np.asarray(be2) - np.asarray(m2) * s2).astype(np.float32)

    # 1x1 conv weight (Cin, Cmid) with BN2 scale folded in, expanded to a
    # block-diagonal (W*Cin, W*Cmid) matrix so the matmul stays in row layout.
    w1 = np.asarray(w1_oihw)[:, :, 0, 0].T.astype(np.float32)   # (Cin, Cmid)
    w1f = w1 * s2[None, :]
    w1blk = np.kron(np.eye(W, dtype=np.float32), w1f)           # (W*Cin, W*Cmid)

    # 3x3 conv weight as a banded (3*W*Cmid, W*Cg) matrix: rows grouped by the
    # vertical tap di, and within each group the horizontal taps + zero padding
    # are baked into the (wi -> wo) band structure.
    w2 = np.transpose(np.asarray(w2_oihw), (2, 3, 1, 0)).astype(np.float32)  # HWIO
    w2big = np.zeros((3 * W * cmid, W * cg), np.float32)
    for di in range(3):
        for dj in range(3):
            for wo in range(W):
                wi = wo + dj - 1
                if 0 <= wi < W:
                    r0 = di * W * cmid + wi * cmid
                    c0 = wo * cg
                    w2big[r0:r0 + cmid, c0:c0 + cg] = w2[di, dj]

    # Per-pixel tiled BN vectors so the affine ops are lane-dense too.
    s1t = np.tile(s1, W).reshape(1, W * in_channel)
    b1t = np.tile(b1, W).reshape(1, W * in_channel)
    b2t = np.tile(b2, W).reshape(1, W * cmid)

    kernel_params = tuple(jnp.asarray(a) for a in (s1t, b1t, w1blk, b2t, w2big))
    return kernel_params, raw


# ------------------------- pure-JAX reference --------------------------------
def reference_forward(x, raw):
    def bn(z, g, b, m, v):
        return ((z - m[None, :, None, None]) / jnp.sqrt(v + EPS)[None, :, None, None]
                * g[None, :, None, None] + b[None, :, None, None])
    t = jnp.maximum(bn(x, raw['g1'], raw['be1'], raw['m1'], raw['v1']), 0.0)
    y = lax.conv_general_dilated(t, raw['w1'], (1, 1), 'VALID',
                                 dimension_numbers=('NCHW', 'OIHW', 'NCHW'))
    y = jnp.maximum(bn(y, raw['g2'], raw['be2'], raw['m2'], raw['v2']), 0.0)
    out = lax.conv_general_dilated(y, raw['w2'], (1, 1), ((1, 1), (1, 1)),
                                   dimension_numbers=('NCHW', 'OIHW', 'NCHW'))
    return jnp.concatenate([x, out], axis=1)


if __name__ == "__main__":
    # DenseLayer(in_channel=4, growth_rate=8, bn_size=4, dropout=0.0)
    N, Cin, H, W = 2, 4, 16, 16
    growth_rate, bn_size = 8, 4

    key = jax.random.PRNGKey(0)
    kx, kp = jax.random.split(key)
    x = jax.random.normal(kx, (N, Cin, H, W), jnp.float32)

    kernel_params, raw = make_params(kp, Cin, growth_rate, bn_size, W)

    fwd = jax.jit(dense_layer_forward)
    out = jax.block_until_ready(fwd(x, kernel_params))

    assert out.shape == (N, Cin + growth_rate, H, W), out.shape

    ref = jax.block_until_ready(reference_forward(x, raw))
    assert jnp.allclose(out, ref, rtol=1e-4, atol=2e-4), \
        float(jnp.max(jnp.abs(out - ref)))

    print("KERNEL_OK")
</pallas_src>

<mosaic_0001>
module attributes {stable_mosaic.version = 11 : i64} {
  func.func @dense_layer_kernel(%arg0: i32, %arg1: memref<1x16x64xf32, #tpu.memory_space<vmem>>, %arg2: memref<1x64xf32, #tpu.memory_space<vmem>>, %arg3: memref<1x64xf32, #tpu.memory_space<vmem>>, %arg4: memref<64x512xf32, #tpu.memory_space<vmem>>, %arg5: memref<1x512xf32, #tpu.memory_space<vmem>>, %arg6: memref<1536x128xf32, #tpu.memory_space<vmem>>, %arg7: memref<1x16x128xf32, #tpu.memory_space<vmem>>) attributes {dimension_semantics = [#tpu.dimension_semantics<parallel>], iteration_bounds = array<i64: 2>, scalar_prefetch = 0 : i64, scratch_operands = 0 : i64, tpu.core_type = #tpu.core_type<tc>, window_params = [{transform_indices = @transform_0, window_bounds = array<i64: 1, 16, 64>}, {pipeline_mode = #tpu.pipeline_mode<synchronous>, transform_indices = @transform_1, window_bounds = array<i64: 1, 64>}, {pipeline_mode = #tpu.pipeline_mode<synchronous>, transform_indices = @transform_2, window_bounds = array<i64: 1, 64>}, {pipeline_mode = #tpu.pipeline_mode<synchronous>, transform_indices = @transform_3, window_bounds = array<i64: 64, 512>}, {pipeline_mode = #tpu.pipeline_mode<synchronous>, transform_indices = @transform_4, window_bounds = array<i64: 1, 512>}, {pipeline_mode = #tpu.pipeline_mode<synchronous>, transform_indices = @transform_5, window_bounds = array<i64: 1536, 128>}, {transform_indices = @transform_6, window_bounds = array<i64: 1, 16, 128>}]} {
    %c0 = arith.constant 0 : index
    %c0_0 = arith.constant 0 : index
    %c0_1 = arith.constant 0 : index
    %0 = vector.load %arg1[%c0, %c0_0, %c0_1] : memref<1x16x64xf32, #tpu.memory_space<vmem>>, vector<1x16x64xf32>
    %1 = vector.shape_cast %0 : vector<1x16x64xf32> to vector<16x64xf32>
    %c0_2 = arith.constant 0 : index
    %c0_3 = arith.constant 0 : index
    %2 = vector.load %arg2[%c0_2, %c0_3] : memref<1x64xf32, #tpu.memory_space<vmem>>, vector<1x64xf32>
    %3 = vector.broadcast %2 : vector<1x64xf32> to vector<16x64xf32>
    %4 = arith.mulf %1, %3 : vector<16x64xf32>
    %c0_4 = arith.constant 0 : index
    %c0_5 = arith.constant 0 : index
    %5 = vector.load %arg3[%c0_4, %c0_5] : memref<1x64xf32, #tpu.memory_space<vmem>>, vector<1x64xf32>
    %6 = vector.broadcast %5 : vector<1x64xf32> to vector<16x64xf32>
    %7 = arith.addf %4, %6 : vector<16x64xf32>
    %cst = arith.constant 0.000000e+00 : f32
    %8 = vector.broadcast %cst : f32 to vector<16x64xf32>
    %9 = arith.maximumf %7, %8 : vector<16x64xf32>
    %c0_6 = arith.constant 0 : index
    %c0_7 = arith.constant 0 : index
    %10 = vector.load %arg4[%c0_6, %c0_7] : memref<64x512xf32, #tpu.memory_space<vmem>>, vector<64x512xf32>
    %cst_8 = arith.constant dense<0.000000e+00> : vector<16x512xf32>
    %11 = tpu.matmul %9, %10, %cst_8 {dimension_numbers = #tpu.dot_dimension_numbers<[1], [0], [0], [1], [0, 0, 1, 1], [], []>} : vector<16x64xf32>, vector<64x512xf32>, vector<16x512xf32> -> vector<16x512xf32>
    %c0_9 = arith.constant 0 : index
    %c0_10 = arith.constant 0 : index
    %12 = vector.load %arg5[%c0_9, %c0_10] : memref<1x512xf32, #tpu.memory_space<vmem>>, vector<1x512xf32>
    %13 = vector.broadcast %12 : vector<1x512xf32> to vector<16x512xf32>
    %14 = arith.addf %11, %13 : vector<16x512xf32>
    %cst_11 = arith.constant 0.000000e+00 : f32
    %15 = vector.broadcast %cst_11 : f32 to vector<16x512xf32>
    %16 = arith.maximumf %14, %15 : vector<16x512xf32>
    %17 = tpu.iota {dimensions = array<i32: 0>} : vector<16x512xi32>
    %c0_i32 = arith.constant 0 : i32
    %18 = vector.broadcast %c0_i32 : i32 to vector<16x512xi32>
    %19 = arith.cmpi sgt, %17, %18 : vector<16x512xi32>
    %c1_i32 = arith.constant 1 : i32
    %20 = tpu.dynamic_rotate %16 by %c1_i32 dim 0 : vector<16x512xf32>, i32 -> vector<16x512xf32>
    %cst_12 = arith.constant 0.000000e+00 : f32
    %21 = vector.broadcast %cst_12 : f32 to vector<16x512xf32>
    %22 = arith.select %19, %20, %21 : vector<16x512xi1>, vector<16x512xf32>
    %c15_i32 = arith.constant 15 : i32
    %23 = vector.broadcast %c15_i32 : i32 to vector<16x512xi32>
    %24 = arith.cmpi slt, %17, %23 : vector<16x512xi32>
    %c15_i32_13 = arith.constant 15 : i32
    %25 = tpu.dynamic_rotate %16 by %c15_i32_13 dim 0 : vector<16x512xf32>, i32 -> vector<16x512xf32>
    %cst_14 = arith.constant 0.000000e+00 : f32
    %26 = vector.broadcast %cst_14 : f32 to vector<16x512xf32>
    %27 = arith.select %24, %25, %26 : vector<16x512xi1>, vector<16x512xf32>
    %28 = tpu.concatenate %22, %16, %27 in 1 : vector<16x512xf32>, vector<16x512xf32>, vector<16x512xf32> -> vector<16x1536xf32>
    %c0_15 = arith.constant 0 : index
    %c0_16 = arith.constant 0 : index
    %29 = vector.load %arg6[%c0_15, %c0_16] : memref<1536x128xf32, #tpu.memory_space<vmem>>, vector<1536x128xf32>
    %cst_17 = arith.constant dense<0.000000e+00> : vector<16x128xf32>
    %30 = tpu.matmul %28, %29, %cst_17 {dimension_numbers = #tpu.dot_dimension_numbers<[1], [0], [0], [1], [0, 0, 1, 1], [], []>} : vector<16x1536xf32>, vector<1536x128xf32>, vector<16x128xf32> -> vector<16x128xf32>
    %c0_18 = arith.constant 0 : index
    %c0_19 = arith.constant 0 : index
    %c0_20 = arith.constant 0 : index
    %31 = vector.load %arg7[%c0_18, %c0_19, %c0_20] : memref<1x16x128xf32, #tpu.memory_space<vmem>>, vector<1x16x128xf32>
    %32 = vector.shape_cast %31 : vector<1x16x128xf32> to vector<16x128xf32>
    %33 = vector.shape_cast %30 : vector<16x128xf32> to vector<1x16x128xf32>
    tpu.vector_store %arg7[%c0_18, %c0_19, %c0_20], %33 {strides = array<i32>} : memref<1x16x128xf32, #tpu.memory_space<vmem>>, vector<1x16x128xf32>,
    return
  }
  func.func @transform_0(%arg0: i32) -> (i32, i32, i32) {
    %c0_i32 = arith.constant 0 : i32
    %c0_i32_0 = arith.constant 0 : i32
    %c0_i32_1 = arith.constant 0 : i32
    return %arg0, %c0_i32, %c0_i32_0 : i32, i32, i32
  }
  func.func @transform_1(%arg0: i32) -> (i32, i32) {
    %c0_i32 = arith.constant 0 : i32
    %c0_i32_0 = arith.constant 0 : i32
    %c0_i32_1 = arith.constant 0 : i32
    return %c0_i32, %c0_i32_0 : i32, i32
  }
  func.func @transform_2(%arg0: i32) -> (i32, i32) {
    %c0_i32 = arith.constant 0 : i32
    %c0_i32_0 = arith.constant 0 : i32
    %c0_i32_1 = arith.constant 0 : i32
    return %c0_i32, %c0_i32_0 : i32, i32
  }
  func.func @transform_3(%arg0: i32) -> (i32, i32) {
    %c0_i32 = arith.constant 0 : i32
    %c0_i32_0 = arith.constant 0 : i32
    %c0_i32_1 = arith.constant 0 : i32
    return %c0_i32, %c0_i32_0 : i32, i32
  }
  func.func @transform_4(%arg0: i32) -> (i32, i32) {
    %c0_i32 = arith.constant 0 : i32
    %c0_i32_0 = arith.constant 0 : i32
    %c0_i32_1 = arith.constant 0 : i32
    return %c0_i32, %c0_i32_0 : i32, i32
  }
  func.func @transform_5(%arg0: i32) -> (i32, i32) {
    %c0_i32 = arith.constant 0 : i32
    %c0_i32_0 = arith.constant 0 : i32
    %c0_i32_1 = arith.constant 0 : i32
    return %c0_i32, %c0_i32_0 : i32, i32
  }
  func.func @transform_6(%arg0: i32) -> (i32, i32, i32) {
    %c0_i32 = arith.constant 0 : i32
    %c0_i32_0 = arith.constant 0 : i32
    %c0_i32_1 = arith.constant 0 : i32
    return %arg0, %c0_i32, %c0_i32_0 : i32, i32, i32
  }
}

</mosaic_0001>

<llo_original>
// kernel: dense_layer_forward.1
$region0: #{dense_layer_forward.1}
  #allocation0 [shape = 'u32[]', space=smem, size = 0x4, offset = 0x4, fixed_abs, tag = 'smem constant byte address 0x4 - core index']
  #allocation1 [shape = 'u32[144,128]{1,0:T(1,128)}', space=vmem, size = 0x12000, scoped, tag = 'internal scratch']
  %s0 = inlined_call_operand.vmem [shape: f32[2,16,64], index: 0, kind: input, shape index: {}]
  %s1 = inlined_call_operand.vmem [shape: f32[1,64], index: 1, kind: input, shape index: {}]
  %s2 = inlined_call_operand.vmem [shape: f32[1,64], index: 2, kind: input, shape index: {}]
  %s3 = inlined_call_operand.vmem [shape: f32[64,512], index: 3, kind: input, shape index: {}]
  %s4 = inlined_call_operand.vmem [shape: f32[1,512], index: 4, kind: input, shape index: {}]
  %s5 = inlined_call_operand.hbm [shape: f32[1536,128], index: 5, kind: input, shape index: {}]
  %s6 = inlined_call_operand.vmem [shape: f32[2,16,128], index: 6, kind: output, shape index: {}]
  %s7 = sld [smem:[#allocation0]]
  $region61: #{dense_layer_forward.1} parent=0
    _
  %s9 = ssub.s32 1, %s7
  %s10 = scalar_select 0, %s9, %s7
  $region1: #{dense_layer_forward.1} parent=0
    #allocation2 [shape = 'u8[786432]{0}', space=vmem, size = 0xc0000, scoped, tag = 'input window, operand 5, single buffered']
    #allocation3 [shape = 's32[2]{0}', space=sflag, size = 0x8, scoped, tag = 'scoped memory for dense_layer_forward.1']
    %11 = vsyncpa [#allocation3], 0
    loop: start=0, step=1, limit=4
    $region2: #{dense_layer_forward.1} parent=1 // loop_pre_header
      _
    $region3: #{dense_layer_forward.1} parent=1 // loop_header
      %s13 = sphi 0, %s17
      %p14 = scmp.ge.s32.totalorder %s13, 4
      %s23 = sphi 0, %s25
      %s26 = sphi 0, %s23
      %s27 = sphi 0, %s26
      %s43 = sphi 0, %s27
      %s47 = sphi 0, %s47
      %s49 = sphi 0, %s47
      %s50 = sphi 0, %s49
      %s64 = sphi 0, %s50
      %s68 = sphi 0, %s68
      %s70 = sphi 0, %s68
      %s71 = sphi 0, %s70
      %s85 = sphi 0, %s71
      %s89 = sphi 0, %s89
      %s91 = sphi 0, %s89
      %s92 = sphi 0, %s91
      %s106 = sphi 0, %s92
      %s110 = sphi 0, %s110
      %s112 = sphi 0, %s110
      %s113 = sphi 0, %s112
      %s127 = sphi 0, %s113
      %s131 = sphi 0, %s131
      %s133 = sphi 0, %s131
      %s134 = sphi 0, %s133
      %s148 = sphi 0, %s134
      %s154 = sphi 0, %s156
      %s157 = sphi 0, %s154
      %s158 = sphi 0, %s157
      %s174 = sphi 0, %s158
    $region4: #{dense_layer_forward.1} parent=1 // loop_header_branch
      %16 = sbr.rel (%p14) target = $region8
    $region5: #{dense_layer_forward.1} parent=1 // loop_body
      %s18 = ssub.s32 %s13, 1
      %s19 = ssub.s32 %s13, 2
      %s20 = sadd.s32 %s13, 1
      %s21 = ssub.s32 %s13, %s20
      %p22 = scmp.eq.s32.totalorder %s21, 0
      %s24 = sadd.s32 %s23, 1
      %s25 = scalar_select %p22, %s23, %s24
      %p28 = pneg %p22
      %p29 = scmp.eq.s32.totalorder %s13, 1
      %p30 = por %p28, %p29
      %p31 = scmp.ne.s32.totalorder %s23, %s26
      %p32 = scmp.eq.s32.totalorder %s13, 0
      %p33 = por %p31, %p32
      %p34 = scmp.ne.s32.totalorder %s23, %s26
      %p35 = scmp.eq.s32.totalorder %s18, 1
      %p36 = por %p34, %p35
      %p37 = scmp.ne.s32.totalorder %s26, %s27
      %p38 = scmp.eq.s32.totalorder %s18, 0
      %p39 = por %p37, %p38
      %p40 = scmp.ne.s32.totalorder %s26, %s27
      %p41 = scmp.eq.s32.totalorder %s19, 1
      %p42 = por %p40, %p41
      %p44 = scmp.ne.s32.totalorder %s27, %s43
      %p45 = scmp.eq.s32.totalorder %s19, 0
      %p46 = por %p44, %p45
      %s48 = sadd.s32 %s47, 1
      %p51 = scmp.eq.s32.totalorder %s13, 1
      %p52 = scmp.ne.s32.totalorder %s47, %s49
      %p53 = scmp.eq.s32.totalorder %s13, 0
      %p54 = por %p52, %p53
      %p55 = scmp.ne.s32.totalorder %s47, %s49
      %p56 = scmp.eq.s32.totalorder %s18, 1
      %p57 = por %p55, %p56
      %p58 = scmp.ne.s32.totalorder %s49, %s50
      %p59 = scmp.eq.s32.totalorder %s18, 0
      %p60 = por %p58, %p59
      %p61 = scmp.ne.s32.totalorder %s49, %s50
      %p62 = scmp.eq.s32.totalorder %s19, 1
      %p63 = por %p61, %p62
      %p65 = scmp.ne.s32.totalorder %s50, %s64
      %p66 = scmp.eq.s32.totalorder %s19, 0
      %p67 = por %p65, %p66
      %s69 = sadd.s32 %s68, 1
      %p72 = scmp.eq.s32.totalorder %s13, 1
      %p73 = scmp.ne.s32.totalorder %s68, %s70
      %p74 = scmp.eq.s32.totalorder %s13, 0
      %p75 = por %p73, %p74
      %p76 = scmp.ne.s32.totalorder %s68, %s70
      %p77 = scmp.eq.s32.totalorder %s18, 1
      %p78 = por %p76, %p77
      %p79 = scmp.ne.s32.totalorder %s70, %s71
      %p80 = scmp.eq.s32.totalorder %s18, 0
      %p81 = por %p79, %p80
      %p82 = scmp.ne.s32.totalorder %s70, %s71
      %p83 = scmp.eq.s32.totalorder %s19, 1
      %p84 = por %p82, %p83
      %p86 = scmp.ne.s32.totalorder %s71, %s85
      %p87 = scmp.eq.s32.totalorder %s19, 0
      %p88 = por %p86, %p87
      %s90 = sadd.s32 %s89, 1
      %p93 = scmp.eq.s32.totalorder %s13, 1
      %p94 = scmp.ne.s32.totalorder %s89, %s91
      %p95 = scmp.eq.s32.totalorder %s13, 0
      %p96 = por %p94, %p95
      %p97 = scmp.ne.s32.totalorder %s89, %s91
      %p98 = scmp.eq.s32.totalorder %s18, 1
      %p99 = por %p97, %p98
      %p100 = scmp.ne.s32.totalorder %s91, %s92
      %p101 = scmp.eq.s32.totalorder %s18, 0
      %p102 = por %p100, %p101
      %p103 = scmp.ne.s32.totalorder %s91, %s92
      %p104 = scmp.eq.s32.totalorder %s19, 1
      %p105 = por %p103, %p104
      %p107 = scmp.ne.s32.totalorder %s92, %s106
      %p108 = scmp.eq.s32.totalorder %s19, 0
      %p109 = por %p107, %p108
      %s111 = sadd.s32 %s110, 1
      %p114 = scmp.eq.s32.totalorder %s13, 1
      %p115 = scmp.ne.s32.totalorder %s110, %s112
      %p116 = scmp.eq.s32.totalorder %s13, 0
      %p117 = por %p115, %p116
      %p118 = scmp.ne.s32.totalorder %s110, %s112
      %p119 = scmp.eq.s32.totalorder %s18, 1
      %p120 = por %p118, %p119
      %p121 = scmp.ne.s32.totalorder %s112, %s113
      %p122 = scmp.eq.s32.totalorder %s18, 0
      %p123 = por %p121, %p122
      %p124 = scmp.ne.s32.totalorder %s112, %s113
      %p125 = scmp.eq.s32.totalorder %s19, 1
      %p126 = por %p124, %p125
      %p128 = scmp.ne.s32.totalorder %s113, %s127
      %p129 = scmp.eq.s32.totalorder %s19, 0
      %p130 = por %p128, %p129
      %s132 = sadd.s32 %s131, 1
      %p135 = scmp.eq.s32.totalorder %s13, 1
      %p136 = scmp.ne.s32.totalorder %s131, %s133
      %p137 = scmp.eq.s32.totalorder %s13, 0
      %p138 = por %p136, %p137
      %p139 = scmp.ne.s32.totalorder %s131, %s133
      %p140 = scmp.eq.s32.totalorder %s18, 1
      %p141 = por %p139, %p140
      %p142 = scmp.ne.s32.totalorder %s133, %s134
      %p143 = scmp.eq.s32.totalorder %s18, 0
      %p144 = por %p142, %p143
      %p145 = scmp.ne.s32.totalorder %s133, %s134
      %p146 = scmp.eq.s32.totalorder %s19, 1
      %p147 = por %p145, %p146
      %p149 = scmp.ne.s32.totalorder %s134, %s148
      %p150 = scmp.eq.s32.totalorder %s19, 0
      %p151 = por %p149, %p150
      %s152 = ssub.s32 %s13, %s20
      %p153 = scmp.eq.s32.totalorder %s152, 0
      %s155 = sadd.s32 %s154, 1
      %s156 = scalar_select %p153, %s154, %s155
      %p159 = pneg %p153
      %p160 = scmp.eq.s32.totalorder %s13, 1
      %p161 = por %p159, %p160
      %p162 = scmp.ne.s32.totalorder %s154, %s157
      %p163 = scmp.eq.s32.totalorder %s13, 0
      %p164 = por %p162, %p163
      %p165 = scmp.ne.s32.totalorder %s154, %s157
      %p166 = scmp.eq.s32.totalorder %s18, 1
      %p167 = por %p165, %p166
      %p168 = scmp.ne.s32.totalorder %s157, %s158
      %p169 = scmp.eq.s32.totalorder %s18, 0
      %p170 = por %p168, %p169
      %p171 = scmp.ne.s32.totalorder %s157, %s158
      %p172 = scmp.eq.s32.totalorder %s19, 1
      %p173 = por %p171, %p172
      %p175 = scmp.ne.s32.totalorder %s158, %s174
      %p176 = scmp.eq.s32.totalorder %s19, 0
      %p177 = por %p175, %p176
      %p178 = scmp.le.s32.totalorder 1, %s13
      %p179 = scmp.lt.s32.totalorder %s13, 3
      %p180 = pnand %p178, %p179
      %p181 = pneg %p180
      // Predicated region
      $region9: #{dense_layer_forward.1} parent=5 // pred_check
        _
      $region10: #{dense_layer_forward.1} parent=5 // pred_check_branch
        %183 = sbr.rel (%p180) target = $region12
      $region11: #{dense_layer_forward.1} parent=5 // pred_region
        %s184 = ssub.s32 %s13, 1
        // Predicated region
        $region13: #{dense_layer_forward.1} parent=11 // pred_check
          %p185 = pneg %p60
        $region14: #{dense_layer_forward.1} parent=11 // pred_check_branch
          %187 = sbr.rel (%p185) target = $region16
        $region15: #{dense_layer_forward.1} parent=11 // pred_region
          _
        $region16: #{dense_layer_forward.1} parent=11 // pred_fallthru
          _
        // Predicated region
        $region17: #{dense_layer_forward.1} parent=11 // pred_check
          %p188 = pneg %p81
        $region18: #{dense_layer_forward.1} parent=11 // pred_check_branch
          %190 = sbr.rel (%p188) target = $region20
        $region19: #{dense_layer_forward.1} parent=11 // pred_region
          _
        $region20: #{dense_layer_forward.1} parent=11 // pred_fallthru
          _
        // Predicated region
        $region21: #{dense_layer_forward.1} parent=11 // pred_check
          %p191 = pneg %p102
        $region22: #{dense_layer_forward.1} parent=11 // pred_check_branch
          %193 = sbr.rel (%p191) target = $region24
        $region23: #{dense_layer_forward.1} parent=11 // pred_region
          _
        $region24: #{dense_layer_forward.1} parent=11 // pred_fallthru
          _
        // Predicated region
        $region25: #{dense_layer_forward.1} parent=11 // pred_check
          %p194 = pneg %p123
        $region26: #{dense_layer_forward.1} parent=11 // pred_check_branch
          %196 = sbr.rel (%p194) target = $region28
        $region27: #{dense_layer_forward.1} parent=11 // pred_region
          _
        $region28: #{dense_layer_forward.1} parent=11 // pred_fallthru
          _
        // Predicated region
        $region29: #{dense_layer_forward.1} parent=11 // pred_check
          %p197 = pneg %p144
        $region30: #{dense_layer_forward.1} parent=11 // pred_check_branch
          %199 = sbr.rel (%p197) target = $region32
        $region31: #{dense_layer_forward.1} parent=11 // pred_region
          %s201 = ssub.s32 24576, 24576
          %202 = vsyncadd [#allocation3], %s201
          %s203 = sshll.u32 [#allocation2], 4
          %s204 = int_to_ptr.vmem [resolvable:$true] %s203
          %209 = dma.hbm_to_vmem [thread:$0]  %s5, 24576, %s204, [#allocation3], 128, 128, 8
        $region32: #{dense_layer_forward.1} parent=11 // pred_fallthru
          _
      $region12: #{dense_layer_forward.1} parent=5 // pred_fallthru
        _
      %p210 = scmp.lt.s32.totalorder %s13, 2
      // Predicated region
      $region33: #{dense_layer_forward.1} parent=5 // pred_check
        %p211 = pneg %p210
      $region34: #{dense_layer_forward.1} parent=5 // pred_check_branch
        %213 = sbr.rel (%p211) target = $region36
      $region35: #{dense_layer_forward.1} parent=5 // pred_region
        // Predicated region
        $region37: #{dense_layer_forward.1} parent=35 // pred_check
          %p214 = pneg %p33
        $region38: #{dense_layer_forward.1} parent=35 // pred_check_branch
          %216 = sbr.rel (%p214) target = $region40
        $region39: #{dense_layer_forward.1} parent=35 // pred_region
          %p217 = scmp.lt.s32.totalorder %s13, 1
          %s218 = scalar_select %p217, %s13, 1
          %s219 = smul.addr %s218, 2
          %s220 = smul.addr %s219, 8
          %s221 = scalar_lea.vmem %s0, %s220
        $region40: #{dense_layer_forward.1} parent=35 // pred_fallthru
          _
      $region36: #{dense_layer_forward.1} parent=5 // pred_fallthru
        _
      %p222 = scmp.le.s32.totalorder 1, %s13
      %p223 = scmp.lt.s32.totalorder %s13, 3
      %p224 = pnand %p222, %p223
      %p225 = pneg %p224
      // Predicated region
      $region41: #{dense_layer_forward.1} parent=5 // pred_check
        _
      $region42: #{dense_layer_forward.1} parent=5 // pred_check_branch
        %227 = sbr.rel (%p224) target = $region44
      $region43: #{dense_layer_forward.1} parent=5 // pred_region
        %s228 = ssub.s32 %s13, 1
        // Predicated region
        $region45: #{dense_layer_forward.1} parent=43 // pred_check
          %p229 = pneg %p144
        $region46: #{dense_layer_forward.1} parent=43 // pred_check_branch
          %231 = sbr.rel (%p229) target = $region48
        $region47: #{dense_layer_forward.1} parent=43 // pred_region
          %232 = dma.done [#allocation3], 24576
        $region48: #{dense_layer_forward.1} parent=43 // pred_fallthru
          _
        %p233 = scmp.lt.s32.totalorder %s18, 1
        %s234 = scalar_select %p233, %s18, 1
        %s235 = smul.addr %s234, 2
        %s236 = smul.addr %s235, 8
        %s237 = scalar_lea.vmem %s0, %s236
        %p238 = pneg %p39
        %p239 = pneg %p36
        %p240 = pneg %p60
        %p241 = pneg %p57
        %p242 = pneg %p81
        %p243 = pneg %p78
        %p244 = pneg %p102
        %p245 = pneg %p99
        %p246 = pneg %p123
        %p247 = pneg %p120
        %p248 = pneg %p144
        %p249 = pneg %p141
        %p250 = pneg %p170
        %p251 = pneg %p167
        %p252 = scmp.lt.s32.totalorder %s18, 1
        %s253 = scalar_select %p252, %s18, 1
        %s254 = smul.addr %s253, 2
        %s255 = smul.addr %s254, 8
        %s256 = scalar_lea.vmem %s6, %s255
        %p257 = scmp.lt.s32.totalorder %s18, 1
        %s258 = scalar_select %p257, %s18, 1
        %s259 = smul.addr %s258, 2
        %s260 = smul.addr %s259, 8
        %s261 = scalar_lea.vmem %s0, %s260
        %p262 = scmp.lt.s32.totalorder %s18, 1
        %s263 = scalar_select %p262, %s18, 1
        %s264 = smul.addr %s263, 2
        %s265 = smul.addr %s264, 8
        %s266 = scalar_lea.vmem %s6, %s265
        %v267 = vld [vmem:[%s261] sm:$0xff]
        %v268 = vld [vmem:[%s261 + $0x8] sm:$0xff]
        %v269 = vld [vmem:[%s1] sm:$0x1]
        %v271 = vlaneseq
        %v272 = vshrl.u32 %v271, 7
        %v273 = vsub.s32 0, %v272
        %v274 = vrot.slane %v269, %v273
        %v276 = vmul.f32 %v267, %v274
        %v277 = vmul.f32 %v268, %v274
        %v278 = vld [vmem:[%s2] sm:$0x1]
        %v280 = vlaneseq
        %v281 = vshrl.u32 %v280, 7
        %v282 = vsub.s32 0, %v281
        %v283 = vrot.slane %v278, %v282
        %v285 = vadd.f32 %v276, %v283
        %v286 = vadd.f32 %v277, %v283
        %v287 = vmax.f32 %v285, 0.0
        %v288 = vmax.f32 %v286, 0.0
        %v289 = vld [vmem:[%s3] sm:$0xff]
        %v290 = vld [vmem:[%s3 + $0x8] sm:$0xff]
        %v291 = vld [vmem:[%s3 + $0x10] sm:$0xff]
        %v292 = vld [vmem:[%s3 + $0x18] sm:$0xff]
        %v293 = vld [vmem:[%s3 + $0x20] sm:$0xff]
        %v294 = vld [vmem:[%s3 + $0x28] sm:$0xff]
        %v295 = vld [vmem:[%s3 + $0x30] sm:$0xff]
        %v296 = vld [vmem:[%s3 + $0x38] sm:$0xff]
        %v297 = vld [vmem:[%s3 + $0x40] sm:$0xff]
        %v298 = vld [vmem:[%s3 + $0x48] sm:$0xff]
        %v299 = vld [vmem:[%s3 + $0x50] sm:$0xff]
        %v300 = vld [vmem:[%s3 + $0x58] sm:$0xff]
        %v301 = vld [vmem:[%s3 + $0x60] sm:$0xff]
        %v302 = vld [vmem:[%s3 + $0x68] sm:$0xff]
        %v303 = vld [vmem:[%s3 + $0x70] sm:$0xff]
        %v304 = vld [vmem:[%s3 + $0x78] sm:$0xff]
        %v305 = vld [vmem:[%s3 + $0x80] sm:$0xff]
        %v306 = vld [vmem:[%s3 + $0x88] sm:$0xff]
        %v307 = vld [vmem:[%s3 + $0x90] sm:$0xff]
        %v308 = vld [vmem:[%s3 + $0x98] sm:$0xff]
        %v309 = vld [vmem:[%s3 + $0xa0] sm:$0xff]
        %v310 = vld [vmem:[%s3 + $0xa8] sm:$0xff]
        %v311 = vld [vmem:[%s3 + $0xb0] sm:$0xff]
        %v312 = vld [vmem:[%s3 + $0xb8] sm:$0xff]
        %v313 = vld [vmem:[%s3 + $0xc0] sm:$0xff]
        %v314 = vld [vmem:[%s3 + $0xc8] sm:$0xff]
        %v315 = vld [vmem:[%s3 + $0xd0] sm:$0xff]
        %v316 = vld [vmem:[%s3 + $0xd8] sm:$0xff]
        %v317 = vld [vmem:[%s3 + $0xe0] sm:$0xff]
        %v318 = vld [vmem:[%s3 + $0xe8] sm:$0xff]
        %v319 = vld [vmem:[%s3 + $0xf0] sm:$0xff]
        %v320 = vld [vmem:[%s3 + $0xf8] sm:$0xff]
        %v321 = vld [vmem:[%s4] sm:$0xf]
        %v323 = vlaneseq
        %v324 = vshrl.u32 %v323, 7
        %v325 = vsub.s32 0, %v324
        %v326 = vrot.slane %v321, %v325
        %v327 = vlaneseq
        %v328 = vshrl.u32 %v327, 7
        %v329 = vsub.s32 1, %v328
        %v330 = vrot.slane %v321, %v329
        %v331 = vlaneseq
        %v332 = vshrl.u32 %v331, 7
        %v333 = vsub.s32 2, %v332
        %v334 = vrot.slane %v321, %v333
        %v335 = vlaneseq
        %v336 = vshrl.u32 %v335, 7
        %v337 = vsub.s32 3, %v336
        %v338 = vrot.slane %v321, %v337
        %vm343 = vcmask 523264
        %v345 = vsel %vm343, %v287, 0
        %v348 = vsel %vm343, %v288, 0
        %350 = vmatprep.subr.mxu0 %v290
        %351 = vmatpush1.msra.mxu0 %v289
        %352 = vmatprep.subr.mxu0 %v294
        %353 = vmatpush1.msra.mxu0 %v293
        %354 = vmatprep.subr.mxu0 %v298
        %355 = vmatpush1.msra.mxu0 %v297
        %356 = vmatprep.subr.mxu0 %v302
        %357 = vmatpush1.msra.mxu0 %v301
        %358 = vmatprep.subr.mxu0 %v306
        %359 = vmatpush1.msra.mxu0 %v305
        %360 = vmatprep.subr.mxu0 %v310
        %361 = vmatpush1.msra.mxu0 %v309
        %362 = vmatprep.subr.mxu0 %v314
        %363 = vmatpush1.msra.mxu0 %v313
        %364 = vmatprep.subr.mxu0 %v318
        %365 = vmatpush1.msra.mxu0 %v317
        %366 = vmatprep.subr.mxu0 0.0
        %367 = vmatpush1.msra.mxu0 0.0
        %368 = vmatprep.subr.mxu0 0.0
        %369 = vmatpush1.msra.mxu0 0.0
        %370 = vmatprep.subr.mxu0 0.0
        %371 = vmatpush1.msra.mxu0 0.0
        %372 = vmatprep.subr.mxu0 0.0
        %373 = vmatpush1.msra.mxu0 0.0
        %374 = vmatprep.subr.mxu0 0.0
        %375 = vmatpush1.msra.mxu0 0.0
        %376 = vmatprep.subr.mxu0 0.0
        %377 = vmatpush1.msra.mxu0 0.0
        %378 = vmatprep.subr.mxu0 0.0
        %379 = vmatpush1.msra.mxu0 0.0
        %380 = vmatprep.subr.mxu0 0.0
        %381 = vmatpush1.msra.mxu0 0.0
        %382 = vmatprep.subr.mxu0 0.0
        %383 = vmatpush1.msra.mxu0 0.0
        %384 = vmatprep.subr.mxu0 0.0
        %385 = vmatpush1.msra.mxu0 0.0
        %386 = vmatprep.subr.mxu0 0.0
        %387 = vmatpush1.msra.mxu0 0.0
        %388 = vmatprep.subr.mxu0 0.0
        %389 = vmatpush1.msra.mxu0 0.0
        %390 = vmatprep.subr.mxu0 0.0
        %391 = vmatpush1.msra.mxu0 0.0
        %392 = vmatprep.subr.mxu0 0.0
        %393 = vmatpush1.msra.mxu0 0.0
        %394 = vmatprep.subr.mxu0 0.0
        %395 = vmatpush1.msra.mxu0 0.0
        %396 = vmatprep.subr.mxu0 0.0
        %397 = vmatpush1.msra.mxu0 0.0
        %398 = vmatprep.subr.mxu0 0.0
        %399 = vmatpush1.msra.mxu0 0.0
        %400 = vmatprep.subr.mxu0 0.0
        %401 = vmatpush1.msra.mxu0 0.0
        %402 = vmatprep.subr.mxu0 0.0
        %403 = vmatpush1.msra.mxu0 0.0
        %404 = vmatprep.subr.mxu0 0.0
        %405 = vmatpush1.msra.mxu0 0.0
        %406 = vmatprep.subr.mxu0 0.0
        %407 = vmatpush1.msra.mxu0 0.0
        %408 = vmatprep.subr.mxu0 0.0
        %409 = vmatpush1.msra.mxu0 0.0
        %410 = vmatprep.subr.mxu0 0.0
        %411 = vmatpush1.msra.mxu0 0.0
        %412 = vmatprep.subr.mxu0 0.0
        %413 = vmatpush1.msra.mxu0 0.0
        %414 = vmatprep.mubr.f32.mxu0 0.0
        %415 = vmatmul.mubr.f32.gmra.mrb[0].mxu0 %v345
        %v416 = vpop.f32.mrb[0].mxu0
        %v417 = vadd.f32 %v326, %v416
        %v418 = vpop.f32.mrb[0].mxu0
        %v419 = vadd.f32 %v330, %v418
        %420 = vmatprep.mubr.f32.mxu0 0.0
        %421 = vmatmul.mubr.f32.gmra.mrb[0].mxu0 %v348
        %v422 = vpop.f32.mrb[0].mxu0
        %v423 = vadd.f32 %v326, %v422
        %v424 = vpop.f32.mrb[0].mxu0
        %v425 = vadd.f32 %v330, %v424
        %426 = vdwg.mxu0
        %427 = vmatprep.subr.mxu0 %v292
        %428 = vmatpush1.msra.mxu0 %v291
        %429 = vmatprep.subr.mxu0 %v296
        %430 = vmatpush1.msra.mxu0 %v295
        %431 = vmatprep.subr.mxu0 %v300
        %432 = vmatpush1.msra.mxu0 %v299
        %433 = vmatprep.subr.mxu0 %v304
        %434 = vmatpush1.msra.mxu0 %v303
        %435 = vmatprep.subr.mxu0 %v308
        %436 = vmatpush1.msra.mxu0 %v307
        %437 = vmatprep.subr.mxu0 %v312
        %438 = vmatpush1.msra.mxu0 %v311
        %439 = vmatprep.subr.mxu0 %v316
        %440 = vmatpush1.msra.mxu0 %v315
        %441 = vmatprep.subr.mxu0 %v320
        %442 = vmatpush1.msra.mxu0 %v319
        %443 = vmatprep.subr.mxu0 0.0
        %444 = vmatpush1.msra.mxu0 0.0
        %445 = vmatprep.subr.mxu0 0.0
        %446 = vmatpush1.msra.mxu0 0.0
        %447 = vmatprep.subr.mxu0 0.0
        %448 = vmatpush1.msra.mxu0 0.0
        %449 = vmatprep.subr.mxu0 0.0
        %450 = vmatpush1.msra.mxu0 0.0
        %451 = vmatprep.subr.mxu0 0.0
        %452 = vmatpush1.msra.mxu0 0.0
        %453 = vmatprep.subr.mxu0 0.0
        %454 = vmatpush1.msra.mxu0 0.0
        %455 = vmatprep.subr.mxu0 0.0
        %456 = vmatpush1.msra.mxu0 0.0
        %457 = vmatprep.subr.mxu0 0.0
        %458 = vmatpush1.msra.mxu0 0.0
        %459 = vmatprep.subr.mxu0 0.0
        %460 = vmatpush1.msra.mxu0 0.0
        %461 = vmatprep.subr.mxu0 0.0
        %462 = vmatpush1.msra.mxu0 0.0
        %463 = vmatprep.subr.mxu0 0.0
        %464 = vmatpush1.msra.mxu0 0.0
        %465 = vmatprep.subr.mxu0 0.0
        %466 = vmatpush1.msra.mxu0 0.0
        %467 = vmatprep.subr.mxu0 0.0
        %468 = vmatpush1.msra.mxu0 0.0
        %469 = vmatprep.subr.mxu0 0.0
        %470 = vmatpush1.msra.mxu0 0.0
        %471 = vmatprep.subr.mxu0 0.0
        %472 = vmatpush1.msra.mxu0 0.0
        %473 = vmatprep.subr.mxu0 0.0
        %474 = vmatpush1.msra.mxu0 0.0
        %475 = vmatprep.subr.mxu0 0.0
        %476 = vmatpush1.msra.mxu0 0.0
        %477 = vmatprep.subr.mxu0 0.0
        %478 = vmatpush1.msra.mxu0 0.0
        %479 = vmatprep.subr.mxu0 0.0
        %480 = vmatpush1.msra.mxu0 0.0
        %481 = vmatprep.subr.mxu0 0.0
        %482 = vmatpush1.msra.mxu0 0.0
        %483 = vmatprep.subr.mxu0 0.0
        %484 = vmatpush1.msra.mxu0 0.0
        %485 = vmatprep.subr.mxu0 0.0
        %486 = vmatpush1.msra.mxu0 0.0
        %487 = vmatprep.subr.mxu0 0.0
        %488 = vmatpush1.msra.mxu0 0.0
        %489 = vmatprep.subr.mxu0 0.0
        %490 = vmatpush1.msra.mxu0 0.0
        %491 = vmatprep.mubr.f32.mxu0 0.0
        %492 = vmatmul.mubr.f32.gmra.mrb[0].mxu0 %v345
        %v493 = vpop.f32.mrb[0].mxu0
        %v494 = vadd.f32 %v334, %v493
        %v495 = vpop.f32.mrb[0].mxu0
        %v496 = vadd.f32 %v338, %v495
        %497 = vmatprep.mubr.f32.mxu0 0.0
        %498 = vmatmul.mubr.f32.gmra.mrb[0].mxu0 %v348
        %v499 = vpop.f32.mrb[0].mxu0
        %v500 = vadd.f32 %v334, %v499
        %v501 = vpop.f32.mrb[0].mxu0
        %v502 = vadd.f32 %v338, %v501
        %503 = vdwg.mxu0
        %v504 = vmax.f32 %v417, 0.0
        %v505 = vmax.f32 %v419, 0.0
        %v506 = vmax.f32 %v494, 0.0
        %v507 = vmax.f32 %v496, 0.0
        %v508 = vmax.f32 %v423, 0.0
        %v509 = vmax.f32 %v425, 0.0
        %v510 = vmax.f32 %v500, 0.0
        %v511 = vmax.f32 %v502, 0.0
        %v512 = vlaneseq
        %v513 = vshrl.u32 %v512, 7
        %v514 = vadd.s32 %v513, 8
        %vm515 = vcmp.gt.s32.totalorder %v513, 0
        %vm516 = vcmp.gt.s32.totalorder %v514, 0
        %v517 = vrot.slane %v504, 7
        %v518 = vrot.slane %v505, 7
        %v519 = vrot.slane %v506, 7
        %v520 = vrot.slane %v507, 7
        %v521 = vrot.slane %v508, 7
        %v522 = vrot.slane %v509, 7
        %v523 = vrot.slane %v510, 7
        %v524 = vrot.slane %v511, 7
        %vm525 = vcmp.lt.s32.totalorder %v513, 1
        %v526 = vsel %vm525, %v517, %v521
        %v527 = vsel %vm525, %v518, %v522
        %v528 = vsel %vm525, %v519, %v523
        %v529 = vsel %vm525, %v520, %v524
        %v530 = vsel %vm525, %v521, %v517
        %v531 = vsel %vm525, %v522, %v518
        %v532 = vsel %vm525, %v523, %v519
        %v533 = vsel %vm525, %v524, %v520
        %v534 = vsel %vm515, %v530, 0.0
        %v535 = vsel %vm515, %v531, 0.0
        %v536 = vsel %vm515, %v532, 0.0
        %v537 = vsel %vm515, %v533, 0.0
        %v538 = vsel %vm516, %v526, 0.0
        %v539 = vsel %vm516, %v527, 0.0
        %v540 = vsel %vm516, %v528, 0.0
        %v541 = vsel %vm516, %v529, 0.0
        %vm542 = vcmp.lt.s32.totalorder %v513, 15
        %vm543 = vcmp.lt.s32.totalorder %v514, 15
        %v544 = vrot.slane %v504, 1
        %v545 = vrot.slane %v505, 1
        %v546 = vrot.slane %v506, 1
        %v547 = vrot.slane %v507, 1
        %v548 = vrot.slane %v508, 1
        %v549 = vrot.slane %v509, 1
        %v550 = vrot.slane %v510, 1
        %v551 = vrot.slane %v511, 1
        %vm552 = vcmp.lt.s32.totalorder %v513, 7
        %v553 = vsel %vm552, %v544, %v548
        %v554 = vsel %vm552, %v545, %v549
        %v555 = vsel %vm552, %v546, %v550
        %v556 = vsel %vm552, %v547, %v551
        %v557 = vsel %vm552, %v548, %v544
        %v558 = vsel %vm552, %v549, %v545
        %v559 = vsel %vm552, %v550, %v546
        %v560 = vsel %vm552, %v551, %v547
        %v561 = vsel %vm542, %v553, 0.0
        %v562 = vsel %vm542, %v554, 0.0
        %v563 = vsel %vm542, %v555, 0.0
        %v564 = vsel %vm542, %v556, 0.0
        %v565 = vsel %vm543, %v557, 0.0
        %v566 = vsel %vm543, %v558, 0.0
        %v567 = vsel %vm543, %v559, 0.0
        %v568 = vsel %vm543, %v560, 0.0
        %v569 = vld [vmem:[#allocation2] sm:$0xff]
        %v570 = vld [vmem:[#allocation2 + $0x8] sm:$0xff]
        %v571 = vld [vmem:[#allocation2 + $0x10] sm:$0xff]
        %v572 = vld [vmem:[#allocation2 + $0x18] sm:$0xff]
        %v573 = vld [vmem:[#allocation2 + $0x20] sm:$0xff]
        %v574 = vld [vmem:[#allocation2 + $0x28] sm:$0xff]
        %v575 = vld [vmem:[#allocation2 + $0x30] sm:$0xff]
        %v576 = vld [vmem:[#allocation2 + $0x38] sm:$0xff]
        %v577 = vld [vmem:[#allocation2 + $0x40] sm:$0xff]
        %v578 = vld [vmem:[#allocation2 + $0x48] sm:$0xff]
        %v579 = vld [vmem:[#allocation2 + $0x50] sm:$0xff]
        %v580 = vld [vmem:[#allocation2 + $0x58] sm:$0xff]
        %v581 = vld [vmem:[#allocation2 + $0x60] sm:$0xff]
        %v582 = vld [vmem:[#allocation2 + $0x68] sm:$0xff]
        %v583 = vld [vmem:[#allocation2 + $0x70] sm:$0xff]
        %v584 = vld [vmem:[#allocation2 + $0x78] sm:$0xff]
        %v585 = vld [vmem:[#allocation2 + $0x80] sm:$0xff]
        %v586 = vld [vmem:[#allocation2 + $0x88] sm:$0xff]
        %v587 = vld [vmem:[#allocation2 + $0x90] sm:$0xff]
        %v588 = vld [vmem:[#allocation2 + $0x98] sm:$0xff]
        %v589 = vld [vmem:[#allocation2 + $0xa0] sm:$0xff]
        %v590 = vld [vmem:[#allocation2 + $0xa8] sm:$0xff]
        %v591 = vld [vmem:[#allocation2 + $0xb0] sm:$0xff]
        %v592 = vld [vmem:[#allocation2 + $0xb8] sm:$0xff]
        %v593 = vld [vmem:[#allocation2 + $0xc0] sm:$0xff]
        %v594 = vld [vmem:[#allocation2 + $0xc8] sm:$0xff]
        %v595 = vld [vmem:[#allocation2 + $0xd0] sm:$0xff]
        %v596 = vld [vmem:[#allocation2 + $0xd8] sm:$0xff]
        %v597 = vld [vmem:[#allocation2 + $0xe0] sm:$0xff]
        %v598 = vld [vmem:[#allocation2 + $0xe8] sm:$0xff]
        %v599 = vld [vmem:[#allocation2 + $0xf0] sm:$0xff]
        %v600 = vld [vmem:[#allocation2 + $0xf8] sm:$0xff]
        %v601 = vld [vmem:[#allocation2 + $0x100] sm:$0xff]
        %v602 = vld [vmem:[#allocation2 + $0x108] sm:$0xff]
        %v603 = vld [vmem:[#allocation2 + $0x110] sm:$0xff]
        %v604 = vld [vmem:[#allocation2 + $0x118] sm:$0xff]
        %v605 = vld [vmem:[#allocation2 + $0x120] sm:$0xff]
        %v606 = vld [vmem:[#allocation2 + $0x128] sm:$0xff]
        %v607 = vld [vmem:[#allocation2 + $0x130] sm:$0xff]
        %v608 = vld [vmem:[#allocation2 + $0x138] sm:$0xff]
        %v609 = vld [vmem:[#allocation2 + $0x140] sm:$0xff]
        %v610 = vld [vmem:[#allocation2 + $0x148] sm:$0xff]
        %v611 = vld [vmem:[#allocation2 + $0x150] sm:$0xff]
        %v612 = vld [vmem:[#allocation2 + $0x158] sm:$0xff]
        %v613 = vld [vmem:[#allocation2 + $0x160] sm:$0xff]
        %v614 = vld [vmem:[#allocation2 + $0x168] sm:$0xff]
        %v615 = vld [vmem:[#allocation2 + $0x170] sm:$0xff]
        %v616 = vld [vmem:[#allocation2 + $0x178] sm:$0xff]
        %v617 = vld [vmem:[#allocation2 + $0x180] sm:$0xff]
        %v618 = vld [vmem:[#allocation2 + $0x188] sm:$0xff]
        %v619 = vld [vmem:[#allocation2 + $0x190] sm:$0xff]
        %v620 = vld [vmem:[#allocation2 + $0x198] sm:$0xff]
        %v621 = vld [vmem:[#allocation2 + $0x1a0] sm:$0xff]
        %v622 = vld [vmem:[#allocation2 + $0x1a8] sm:$0xff]
        %v623 = vld [vmem:[#allocation2 + $0x1b0] sm:$0xff]
        %v624 = vld [vmem:[#allocation2 + $0x1b8] sm:$0xff]
        %v625 = vld [vmem:[#allocation2 + $0x1c0] sm:$0xff]
        %v626 = vld [vmem:[#allocation2 + $0x1c8] sm:$0xff]
        %v627 = vld [vmem:[#allocation2 + $0x1d0] sm:$0xff]
        %v628 = vld [vmem:[#allocation2 + $0x1d8] sm:$0xff]
        %v629 = vld [vmem:[#allocation2 + $0x1e0] sm:$0xff]
        %v630 = vld [vmem:[#allocation2 + $0x1e8] sm:$0xff]
        %v631 = vld [vmem:[#allocation2 + $0x1f0] sm:$0xff]
        %v632 = vld [vmem:[#allocation2 + $0x1f8] sm:$0xff]
        %v633 = vld [vmem:[#allocation2 + $0x200] sm:$0xff]
        %v634 = vld [vmem:[#allocation2 + $0x208] sm:$0xff]
        %v635 = vld [vmem:[#allocation2 + $0x210] sm:$0xff]
        %v636 = vld [vmem:[#allocation2 + $0x218] sm:$0xff]
        %v637 = vld [vmem:[#allocation2 + $0x220] sm:$0xff]
        %v638 = vld [vmem:[#allocation2 + $0x228] sm:$0xff]
        %v639 = vld [vmem:[#allocation2 + $0x230] sm:$0xff]
        %v640 = vld [vmem:[#allocation2 + $0x238] sm:$0xff]
        %v641 = vld [vmem:[#allocation2 + $0x240] sm:$0xff]
        %v642 = vld [vmem:[#allocation2 + $0x248] sm:$0xff]
        %v643 = vld [vmem:[#allocation2 + $0x250] sm:$0xff]
        %v644 = vld [vmem:[#allocation2 + $0x258] sm:$0xff]
        %v645 = vld [vmem:[#allocation2 + $0x260] sm:$0xff]
        %v646 = vld [vmem:[#allocation2 + $0x268] sm:$0xff]
        %v647 = vld [vmem:[#allocation2 + $0x270] sm:$0xff]
        %v648 = vld [vmem:[#allocation2 + $0x278] sm:$0xff]
        %v649 = vld [vmem:[#allocation2 + $0x280] sm:$0xff]
        %v650 = vld [vmem:[#allocation2 + $0x288] sm:$0xff]
        %v651 = vld [vmem:[#allocation2 + $0x290] sm:$0xff]
        %v652 = vld [vmem:[#allocation2 + $0x298] sm:$0xff]
        %v653 = vld [vmem:[#allocation2 + $0x2a0] sm:$0xff]
        %v654 = vld [vmem:[#allocation2 + $0x2a8] sm:$0xff]
        %v655 = vld [vmem:[#allocation2 + $0x2b0] sm:$0xff]
        %v656 = vld [vmem:[#allocation2 + $0x2b8] sm:$0xff]
        %v657 = vld [vmem:[#allocation2 + $0x2c0] sm:$0xff]
        %v658 = vld [vmem:[#allocation2 + $0x2c8] sm:$0xff]
        %v659 = vld [vmem:[#allocation2 + $0x2d0] sm:$0xff]
        %v660 = vld [vmem:[#allocation2 + $0x2d8] sm:$0xff]
        %v661 = vld [vmem:[#allocation2 + $0x2e0] sm:$0xff]
        %v662 = vld [vmem:[#allocation2 + $0x2e8] sm:$0xff]
        %v663 = vld [vmem:[#allocation2 + $0x2f0] sm:$0xff]
        %v664 = vld [vmem:[#allocation2 + $0x2f8] sm:$0xff]
        %v665 = vld [vmem:[#allocation2 + $0x300] sm:$0xff]
        %v666 = vld [vmem:[#allocation2 + $0x308] sm:$0xff]
        %v667 = vld [vmem:[#allocation2 + $0x310] sm:$0xff]
        %v668 = vld [vmem:[#allocation2 + $0x318] sm:$0xff]
        %v669 = vld [vmem:[#allocation2 + $0x320] sm:$0xff]
        %v670 = vld [vmem:[#allocation2 + $0x328] sm:$0xff]
        %v671 = vld [vmem:[#allocation2 + $0x330] sm:$0xff]
        %v672 = vld [vmem:[#allocation2 + $0x338] sm:$0xff]
        %v673 = vld [vmem:[#allocation2 + $0x340] sm:$0xff]
        %v674 = vld [vmem:[#allocation2 + $0x348] sm:$0xff]
        %v675 = vld [vmem:[#allocation2 + $0x350] sm:$0xff]
        %v676 = vld [vmem:[#allocation2 + $0x358] sm:$0xff]
        %v677 = vld [vmem:[#allocation2 + $0x360] sm:$0xff]
        %v678 = vld [vmem:[#allocation2 + $0x368] sm:$0xff]
        %v679 = vld [vmem:[#allocation2 + $0x370] sm:$0xff]
        %v680 = vld [vmem:[#allocation2 + $0x378] sm:$0xff]
        %v681 = vld [vmem:[#allocation2 + $0x380] sm:$0xff]
        %v682 = vld [vmem:[#allocation2 + $0x388] sm:$0xff]
        %v683 = vld [vmem:[#allocation2 + $0x390] sm:$0xff]
        %v684 = vld [vmem:[#allocation2 + $0x398] sm:$0xff]
        %v685 = vld [vmem:[#allocation2 + $0x3a0] sm:$0xff]
        %v686 = vld [vmem:[#allocation2 + $0x3a8] sm:$0xff]
        %v687 = vld [vmem:[#allocation2 + $0x3b0] sm:$0xff]
        %v688 = vld [vmem:[#allocation2 + $0x3b8] sm:$0xff]
        %v689 = vld [vmem:[#allocation2 + $0x3c0] sm:$0xff]
        %v690 = vld [vmem:[#allocation2 + $0x3c8] sm:$0xff]
        %v691 = vld [vmem:[#allocation2 + $0x3d0] sm:$0xff]
        %v692 = vld [vmem:[#allocation2 + $0x3d8] sm:$0xff]
        %v693 = vld [vmem:[#allocation2 + $0x3e0] sm:$0xff]
        %v694 = vld [vmem:[#allocation2 + $0x3e8] sm:$0xff]
        %v695 = vld [vmem:[#allocation2 + $0x3f0] sm:$0xff]
        %v696 = vld [vmem:[#allocation2 + $0x3f8] sm:$0xff]
        %v697 = vld [vmem:[#allocation2 + $0x400] sm:$0xff]
        %v698 = vld [vmem:[#allocation2 + $0x408] sm:$0xff]
        %v699 = vld [vmem:[#allocation2 + $0x410] sm:$0xff]
        %v700 = vld [vmem:[#allocation2 + $0x418] sm:$0xff]
        %v701 = vld [vmem:[#allocation2 + $0x420] sm:$0xff]
        %v702 = vld [vmem:[#allocation2 + $0x428] sm:$0xff]
        %v703 = vld [vmem:[#allocation2 + $0x430] sm:$0xff]
        %v704 = vld [vmem:[#allocation2 + $0x438] sm:$0xff]
        %v705 = vld [vmem:[#allocation2 + $0x440] sm:$0xff]
        %v706 = vld [vmem:[#allocation2 + $0x448] sm:$0xff]
        %v707 = vld [vmem:[#allocation2 + $0x450] sm:$0xff]
        %v708 = vld [vmem:[#allocation2 + $0x458] sm:$0xff]
        %v709 = vld [vmem:[#allocation2 + $0x460] sm:$0xff]
        %v710 = vld [vmem:[#allocation2 + $0x468] sm:$0xff]
        %v711 = vld [vmem:[#allocation2 + $0x470] sm:$0xff]
        %v712 = vld [vmem:[#allocation2 + $0x478] sm:$0xff]
        %v713 = vld [vmem:[#allocation2 + $0x480] sm:$0xff]
        %v714 = vld [vmem:[#allocation2 + $0x488] sm:$0xff]
        %v715 = vld [vmem:[#allocation2 + $0x490] sm:$0xff]
        %v716 = vld [vmem:[#allocation2 + $0x498] sm:$0xff]
        %v717 = vld [vmem:[#allocation2 + $0x4a0] sm:$0xff]
        %v718 = vld [vmem:[#allocation2 + $0x4a8] sm:$0xff]
        %v719 = vld [vmem:[#allocation2 + $0x4b0] sm:$0xff]
        %v720 = vld [vmem:[#allocation2 + $0x4b8] sm:$0xff]
        %v721 = vld [vmem:[#allocation2 + $0x4c0] sm:$0xff]
        %v722 = vld [vmem:[#allocation2 + $0x4c8] sm:$0xff]
        %v723 = vld [vmem:[#allocation2 + $0x4d0] sm:$0xff]
        %v724 = vld [vmem:[#allocation2 + $0x4d8] sm:$0xff]
        %v725 = vld [vmem:[#allocation2 + $0x4e0] sm:$0xff]
        %v726 = vld [vmem:[#allocation2 + $0x4e8] sm:$0xff]
        %v727 = vld [vmem:[#allocation2 + $0x4f0] sm:$0xff]
        %v728 = vld [vmem:[#allocation2 + $0x4f8] sm:$0xff]
        %v729 = vld [vmem:[#allocation2 + $0x500] sm:$0xff]
        %v730 = vld [vmem:[#allocation2 + $0x508] sm:$0xff]
        %v731 = vld [vmem:[#allocation2 + $0x510] sm:$0xff]
        %v732 = vld [vmem:[#allocation2 + $0x518] sm:$0xff]
        %v733 = vld [vmem:[#allocation2 + $0x520] sm:$0xff]
        %v734 = vld [vmem:[#allocation2 + $0x528] sm:$0xff]
        %v735 = vld [vmem:[#allocation2 + $0x530] sm:$0xff]
        %v736 = vld [vmem:[#allocation2 + $0x538] sm:$0xff]
        %v737 = vld [vmem:[#allocation2 + $0x540] sm:$0xff]
        %v738 = vld [vmem:[#allocation2 + $0x548] sm:$0xff]
        %v739 = vld [vmem:[#allocation2 + $0x550] sm:$0xff]
        %v740 = vld [vmem:[#allocation2 + $0x558] sm:$0xff]
        %v741 = vld [vmem:[#allocation2 + $0x560] sm:$0xff]
        %v742 = vld [vmem:[#allocation2 + $0x568] sm:$0xff]
        %v743 = vld [vmem:[#allocation2 + $0x570] sm:$0xff]
        %v744 = vld [vmem:[#allocation2 + $0x578] sm:$0xff]
        %v745 = vld [vmem:[#allocation2 + $0x580] sm:$0xff]
        %v746 = vld [vmem:[#allocation2 + $0x588] sm:$0xff]
        %v747 = vld [vmem:[#allocation2 + $0x590] sm:$0xff]
        %v748 = vld [vmem:[#allocation2 + $0x598] sm:$0xff]
        %v749 = vld [vmem:[#allocation2 + $0x5a0] sm:$0xff]
        %v750 = vld [vmem:[#allocation2 + $0x5a8] sm:$0xff]
        %v751 = vld [vmem:[#allocation2 + $0x5b0] sm:$0xff]
        %v752 = vld [vmem:[#allocation2 + $0x5b8] sm:$0xff]
        %v753 = vld [vmem:[#allocation2 + $0x5c0] sm:$0xff]
        %v754 = vld [vmem:[#allocation2 + $0x5c8] sm:$0xff]
        %v755 = vld [vmem:[#allocation2 + $0x5d0] sm:$0xff]
        %v756 = vld [vmem:[#allocation2 + $0x5d8] sm:$0xff]
        %v757 = vld [vmem:[#allocation2 + $0x5e0] sm:$0xff]
        %v758 = vld [vmem:[#allocation2 + $0x5e8] sm:$0xff]
        %v759 = vld [vmem:[#allocation2 + $0x5f0] sm:$0xff]
        %v760 = vld [vmem:[#allocation2 + $0x5f8] sm:$0xff]
        %761 = vmatprep.subr.mxu0 0.0
        %762 = vmatpush1.msra.mxu0 %v569
        %763 = vmatprep.subr.mxu0 0.0
        %764 = vmatpush1.msra.mxu0 %v570
        %765 = vmatprep.subr.mxu0 0.0
        %766 = vmatpush1.msra.mxu0 %v571
        %767 = vmatprep.subr.mxu0 0.0
        %768 = vmatpush1.msra.mxu0 %v572
        %769 = vmatprep.subr.mxu0 0.0
        %770 = vmatpush1.msra.mxu0 %v573
        %771 = vmatprep.subr.mxu0 0.0
        %772 = vmatpush1.msra.mxu0 %v574
        %773 = vmatprep.subr.mxu0 0.0
        %774 = vmatpush1.msra.mxu0 %v575
        %775 = vmatprep.subr.mxu0 0.0
        %776 = vmatpush1.msra.mxu0 %v576
        %777 = vmatprep.subr.mxu0 0.0
        %778 = vmatpush1.msra.mxu0 %v577
        %779 = vmatprep.subr.mxu0 0.0
        %780 = vmatpush1.msra.mxu0 %v578
        %781 = vmatprep.subr.mxu0 0.0
        %782 = vmatpush1.msra.mxu0 %v579
        %783 = vmatprep.subr.mxu0 0.0
        %784 = vmatpush1.msra.mxu0 %v580
        %785 = vmatprep.subr.mxu0 0.0
        %786 = vmatpush1.msra.mxu0 %v581
        %787 = vmatprep.subr.mxu0 0.0
        %788 = vmatpush1.msra.mxu0 %v582
        %789 = vmatprep.subr.mxu0 0.0
        %790 = vmatpush1.msra.mxu0 %v583
        %791 = vmatprep.subr.mxu0 0.0
        %792 = vmatpush1.msra.mxu0 %v584
        %793 = vmatprep.subr.mxu0 0.0
        %794 = vmatpush1.msra.mxu0 %v585
        %795 = vmatprep.subr.mxu0 0.0
        %796 = vmatpush1.msra.mxu0 %v586
        %797 = vmatprep.subr.mxu0 0.0
        %798 = vmatpush1.msra.mxu0 %v587
        %799 = vmatprep.subr.mxu0 0.0
        %800 = vmatpush1.msra.mxu0 %v588
        %801 = vmatprep.subr.mxu0 0.0
        %802 = vmatpush1.msra.mxu0 %v589
        %803 = vmatprep.subr.mxu0 0.0
        %804 = vmatpush1.msra.mxu0 %v590
        %805 = vmatprep.subr.mxu0 0.0
        %806 = vmatpush1.msra.mxu0 %v591
        %807 = vmatprep.subr.mxu0 0.0
        %808 = vmatpush1.msra.mxu0 %v592
        %809 = vmatprep.subr.mxu0 0.0
        %810 = vmatpush1.msra.mxu0 %v593
        %811 = vmatprep.subr.mxu0 0.0
        %812 = vmatpush1.msra.mxu0 %v594
        %813 = vmatprep.subr.mxu0 0.0
        %814 = vmatpush1.msra.mxu0 %v595
        %815 = vmatprep.subr.mxu0 0.0
        %816 = vmatpush1.msra.mxu0 %v596
        %817 = vmatprep.subr.mxu0 0.0
        %818 = vmatpush1.msra.mxu0 %v597
        %819 = vmatprep.subr.mxu0 0.0
        %820 = vmatpush1.msra.mxu0 %v598
        %821 = vmatprep.subr.mxu0 0.0
        %822 = vmatpush1.msra.mxu0 %v599
        %823 = vmatprep.subr.mxu0 0.0
        %824 = vmatpush1.msra.mxu0 %v600
        %825 = vmatprep.mubr.f32.mxu0 %v535
        %826 = vmatmul.mubr.f32.gmra.mrb[0].mxu0 %v534
        %v827 = vpop.f32.mrb[0].mxu0
        %v828 = vadd.f32 0.0, %v827
        %v829 = vpop.f32.mrb[0].mxu0
        %830 = vmatprep.mubr.f32.mxu0 %v539
        %831 = vmatmul.mubr.f32.gmra.mrb[0].mxu0 %v538
        %v832 = vpop.f32.mrb[0].mxu0
        %v833 = vadd.f32 0.0, %v832
        %v834 = vpop.f32.mrb[0].mxu0
        %835 = vdwg.mxu0
        %836 = vmatprep.subr.mxu0 0.0
        %837 = vmatpush1.msra.mxu0 %v601
        %838 = vmatprep.subr.mxu0 0.0
        %839 = vmatpush1.msra.mxu0 %v602
        %840 = vmatprep.subr.mxu0 0.0
        %841 = vmatpush1.msra.mxu0 %v603
        %842 = vmatprep.subr.mxu0 0.0
        %843 = vmatpush1.msra.mxu0 %v604
        %844 = vmatprep.subr.mxu0 0.0
        %845 = vmatpush1.msra.mxu0 %v605
        %846 = vmatprep.subr.mxu0 0.0
        %847 = vmatpush1.msra.mxu0 %v606
        %848 = vmatprep.subr.mxu0 0.0
        %849 = vmatpush1.msra.mxu0 %v607
        %850 = vmatprep.subr.mxu0 0.0
        %851 = vmatpush1.msra.mxu0 %v608
        %852 = vmatprep.subr.mxu0 0.0
        %853 = vmatpush1.msra.mxu0 %v609
        %854 = vmatprep.subr.mxu0 0.0
        %855 = vmatpush1.msra.mxu0 %v610
        %856 = vmatprep.subr.mxu0 0.0
        %857 = vmatpush1.msra.mxu0 %v611
        %858 = vmatprep.subr.mxu0 0.0
        %859 = vmatpush1.msra.mxu0 %v612
        %860 = vmatprep.subr.mxu0 0.0
        %861 = vmatpush1.msra.mxu0 %v613
        %862 = vmatprep.subr.mxu0 0.0
        %863 = vmatpush1.msra.mxu0 %v614
        %864 = vmatprep.subr.mxu0 0.0
        %865 = vmatpush1.msra.mxu0 %v615
        %866 = vmatprep.subr.mxu0 0.0
        %867 = vmatpush1.msra.mxu0 %v616
        %868 = vmatprep.subr.mxu0 0.0
        %869 = vmatpush1.msra.mxu0 %v617
        %870 = vmatprep.subr.mxu0 0.0
        %871 = vmatpush1.msra.mxu0 %v618
        %872 = vmatprep.subr.mxu0 0.0
        %873 = vmatpush1.msra.mxu0 %v619
        %874 = vmatprep.subr.mxu0 0.0
        %875 = vmatpush1.msra.mxu0 %v620
        %876 = vmatprep.subr.mxu0 0.0
        %877 = vmatpush1.msra.mxu0 %v621
        %878 = vmatprep.subr.mxu0 0.0
        %879 = vmatpush1.msra.mxu0 %v622
        %880 = vmatprep.subr.mxu0 0.0
        %881 = vmatpush1.msra.mxu0 %v623
        %882 = vmatprep.subr.mxu0 0.0
        %883 = vmatpush1.msra.mxu0 %v624
        %884 = vmatprep.subr.mxu0 0.0
        %885 = vmatpush1.msra.mxu0 %v625
        %886 = vmatprep.subr.mxu0 0.0
        %887 = vmatpush1.msra.mxu0 %v626
        %888 = vmatprep.subr.mxu0 0.0
        %889 = vmatpush1.msra.mxu0 %v627
        %890 = vmatprep.subr.mxu0 0.0
        %891 = vmatpush1.msra.mxu0 %v628
        %892 = vmatprep.subr.mxu0 0.0
        %893 = vmatpush1.msra.mxu0 %v629
        %894 = vmatprep.subr.mxu0 0.0
        %895 = vmatpush1.msra.mxu0 %v630
        %896 = vmatprep.subr.mxu0 0.0
        %897 = vmatpush1.msra.mxu0 %v631
        %898 = vmatprep.subr.mxu0 0.0
        %899 = vmatpush1.msra.mxu0 %v632
        %900 = vmatprep.mubr.f32.mxu0 %v537
        %901 = vmatmul.mubr.f32.gmra.mrb[0].mxu0 %v536
        %v902 = vpop.f32.mrb[0].mxu0
        %v903 = vadd.f32 %v828, %v902
        %v904 = vpop.f32.mrb[0].mxu0
        %905 = vmatprep.mubr.f32.mxu0 %v541
        %906 = vmatmul.mubr.f32.gmra.mrb[0].mxu0 %v540
        %v907 = vpop.f32.mrb[0].mxu0
        %v908 = vadd.f32 %v833, %v907
        %v909 = vpop.f32.mrb[0].mxu0
        %910 = vdwg.mxu0
        %911 = vmatprep.subr.mxu0 0.0
        %912 = vmatpush1.msra.mxu0 %v633
        %913 = vmatprep.subr.mxu0 0.0
        %914 = vmatpush1.msra.mxu0 %v634
        %915 = vmatprep.subr.mxu0 0.0
        %916 = vmatpush1.msra.mxu0 %v635
        %917 = vmatprep.subr.mxu0 0.0
        %918 = vmatpush1.msra.mxu0 %v636
        %919 = vmatprep.subr.mxu0 0.0
        %920 = vmatpush1.msra.mxu0 %v637
        %921 = vmatprep.subr.mxu0 0.0
        %922 = vmatpush1.msra.mxu0 %v638
        %923 = vmatprep.subr.mxu0 0.0
        %924 = vmatpush1.msra.mxu0 %v639
        %925 = vmatprep.subr.mxu0 0.0
        %926 = vmatpush1.msra.mxu0 %v640
        %927 = vmatprep.subr.mxu0 0.0
        %928 = vmatpush1.msra.mxu0 %v641
        %929 = vmatprep.subr.mxu0 0.0
        %930 = vmatpush1.msra.mxu0 %v642
        %931 = vmatprep.subr.mxu0 0.0
        %932 = vmatpush1.msra.mxu0 %v643
        %933 = vmatprep.subr.mxu0 0.0
        %934 = vmatpush1.msra.mxu0 %v644
        %935 = vmatprep.subr.mxu0 0.0
        %936 = vmatpush1.msra.mxu0 %v645
        %937 = vmatprep.subr.mxu0 0.0
        %938 = vmatpush1.msra.mxu0 %v646
        %939 = vmatprep.subr.mxu0 0.0
        %940 = vmatpush1.msra.mxu0 %v647
        %941 = vmatprep.subr.mxu0 0.0
        %942 = vmatpush1.msra.mxu0 %v648
        %943 = vmatprep.subr.mxu0 0.0
        %944 = vmatpush1.msra.mxu0 %v649
        %945 = vmatprep.subr.mxu0 0.0
        %946 = vmatpush1.msra.mxu0 %v650
        %947 = vmatprep.subr.mxu0 0.0
        %948 = vmatpush1.msra.mxu0 %v651
        %949 = vmatprep.subr.mxu0 0.0
        %950 = vmatpush1.msra.mxu0 %v652
        %951 = vmatprep.subr.mxu0 0.0
        %952 = vmatpush1.msra.mxu0 %v653
        %953 = vmatprep.subr.mxu0 0.0
        %954 = vmatpush1.msra.mxu0 %v654
        %955 = vmatprep.subr.mxu0 0.0
        %956 = vmatpush1.msra.mxu0 %v655
        %957 = vmatprep.subr.mxu0 0.0
        %958 = vmatpush1.msra.mxu0 %v656
        %959 = vmatprep.subr.mxu0 0.0
        %960 = vmatpush1.msra.mxu0 %v657
        %961 = vmatprep.subr.mxu0 0.0
        %962 = vmatpush1.msra.mxu0 %v658
        %963 = vmatprep.subr.mxu0 0.0
        %964 = vmatpush1.msra.mxu0 %v659
        %965 = vmatprep.subr.mxu0 0.0
        %966 = vmatpush1.msra.mxu0 %v660
        %967 = vmatprep.subr.mxu0 0.0
        %968 = vmatpush1.msra.mxu0 %v661
        %969 = vmatprep.subr.mxu0 0.0
        %970 = vmatpush1.msra.mxu0 %v662
        %971 = vmatprep.subr.mxu0 0.0
        %972 = vmatpush1.msra.mxu0 %v663
        %973 = vmatprep.subr.mxu0 0.0
        %974 = vmatpush1.msra.mxu0 %v664
        %975 = vmatprep.mubr.f32.mxu0 %v505
        %976 = vmatmul.mubr.f32.gmra.mrb[0].mxu0 %v504
        %v977 = vpop.f32.mrb[0].mxu0
        %v978 = vadd.f32 %v903, %v977
        %v979 = vpop.f32.mrb[0].mxu0
        %980 = vmatprep.mubr.f32.mxu0 %v509
        %981 = vmatmul.mubr.f32.gmra.mrb[0].mxu0 %v508
        %v982 = vpop.f32.mrb[0].mxu0
        %v983 = vadd.f32 %v908, %v982
        %v984 = vpop.f32.mrb[0].mxu0
        %985 = vdwg.mxu0
        %986 = vmatprep.subr.mxu0 0.0
        %987 = vmatpush1.msra.mxu0 %v665
        %988 = vmatprep.subr.mxu0 0.0
        %989 = vmatpush1.msra.mxu0 %v666
        %990 = vmatprep.subr.mxu0 0.0
        %991 = vmatpush1.msra.mxu0 %v667
        %992 = vmatprep.subr.mxu0 0.0
        %993 = vmatpush1.msra.mxu0 %v668
        %994 = vmatprep.subr.mxu0 0.0
        %995 = vmatpush1.msra.mxu0 %v669
        %996 = vmatprep.subr.mxu0 0.0
        %997 = vmatpush1.msra.mxu0 %v670
        %998 = vmatprep.subr.mxu0 0.0
        %999 = vmatpush1.msra.mxu0 %v671
        %1000 = vmatprep.subr.mxu0 0.0
        %1001 = vmatpush1.msra.mxu0 %v672
        %1002 = vmatprep.subr.mxu0 0.0
        %1003 = vmatpush1.msra.mxu0 %v673
        %1004 = vmatprep.subr.mxu0 0.0
        %1005 = vmatpush1.msra.mxu0 %v674
        %1006 = vmatprep.subr.mxu0 0.0
        %1007 = vmatpush1.msra.mxu0 %v675
        %1008 = vmatprep.subr.mxu0 0.0
        %1009 = vmatpush1.msra.mxu0 %v676
        %1010 = vmatprep.subr.mxu0 0.0
        %1011 = vmatpush1.msra.mxu0 %v677
        %1012 = vmatprep.subr.mxu0 0.0
        %1013 = vmatpush1.msra.mxu0 %v678
        %1014 = vmatprep.subr.mxu0 0.0
        %1015 = vmatpush1.msra.mxu0 %v679
        %1016 = vmatprep.subr.mxu0 0.0
        %1017 = vmatpush1.msra.mxu0 %v680
        %1018 = vmatprep.subr.mxu0 0.0
        %1019 = vmatpush1.msra.mxu0 %v681
        %1020 = vmatprep.subr.mxu0 0.0
        %1021 = vmatpush1.msra.mxu0 %v682
        %1022 = vmatprep.subr.mxu0 0.0
        %1023 = vmatpush1.msra.mxu0 %v683
        %1024 = vmatprep.subr.mxu0 0.0
        %1025 = vmatpush1.msra.mxu0 %v684
        %1026 = vmatprep.subr.mxu0 0.0
        %1027 = vmatpush1.msra.mxu0 %v685
        %1028 = vmatprep.subr.mxu0 0.0
        %1029 = vmatpush1.msra.mxu0 %v686
        %1030 = vmatprep.subr.mxu0 0.0
        %1031 = vmatpush1.msra.mxu0 %v687
        %1032 = vmatprep.subr.mxu0 0.0
        %1033 = vmatpush1.msra.mxu0 %v688
        %1034 = vmatprep.subr.mxu0 0.0
        %1035 = vmatpush1.msra.mxu0 %v689
        %1036 = vmatprep.subr.mxu0 0.0
        %1037 = vmatpush1.msra.mxu0 %v690
        %1038 = vmatprep.subr.mxu0 0.0
        %1039 = vmatpush1.msra.mxu0 %v691
        %1040 = vmatprep.subr.mxu0 0.0
        %1041 = vmatpush1.msra.mxu0 %v692
        %1042 = vmatprep.subr.mxu0 0.0
        %1043 = vmatpush1.msra.mxu0 %v693
        %1044 = vmatprep.subr.mxu0 0.0
        %1045 = vmatpush1.msra.mxu0 %v694
        %1046 = vmatprep.subr.mxu0 0.0
        %1047 = vmatpush1.msra.mxu0 %v695
        %1048 = vmatprep.subr.mxu0 0.0
        %1049 = vmatpush1.msra.mxu0 %v696
        %1050 = vmatprep.mubr.f32.mxu0 %v507
        %1051 = vmatmul.mubr.f32.gmra.mrb[0].mxu0 %v506
        %v1052 = vpop.f32.mrb[0].mxu0
        %v1053 = vadd.f32 %v978, %v1052
        %v1054 = vpop.f32.mrb[0].mxu0
        %1055 = vmatprep.mubr.f32.mxu0 %v511
        %1056 = vmatmul.mubr.f32.gmra.mrb[0].mxu0 %v510
        %v1057 = vpop.f32.mrb[0].mxu0
        %v1058 = vadd.f32 %v983, %v1057
        %v1059 = vpop.f32.mrb[0].mxu0
        %1060 = vdwg.mxu0
        %1061 = vmatprep.subr.mxu0 0.0
        %1062 = vmatpush1.msra.mxu0 %v697
        %1063 = vmatprep.subr.mxu0 0.0
        %1064 = vmatpush1.msra.mxu0 %v698
        %1065 = vmatprep.subr.mxu0 0.0
        %1066 = vmatpush1.msra.mxu0 %v699
        %1067 = vmatprep.subr.mxu0 0.0
        %1068 = vmatpush1.msra.mxu0 %v700
        %1069 = vmatprep.subr.mxu0 0.0
        %1070 = vmatpush1.msra.mxu0 %v701
        %1071 = vmatprep.subr.mxu0 0.0
        %1072 = vmatpush1.msra.mxu0 %v702
        %1073 = vmatprep.subr.mxu0 0.0
        %1074 = vmatpush1.msra.mxu0 %v703
        %1075 = vmatprep.subr.mxu0 0.0
        %1076 = vmatpush1.msra.mxu0 %v704
        %1077 = vmatprep.subr.mxu0 0.0
        %1078 = vmatpush1.msra.mxu0 %v705
        %1079 = vmatprep.subr.mxu0 0.0
        %1080 = vmatpush1.msra.mxu0 %v706
        %1081 = vmatprep.subr.mxu0 0.0
        %1082 = vmatpush1.msra.mxu0 %v707
        %1083 = vmatprep.subr.mxu0 0.0
        %1084 = vmatpush1.msra.mxu0 %v708
        %1085 = vmatprep.subr.mxu0 0.0
        %1086 = vmatpush1.msra.mxu0 %v709
        %1087 = vmatprep.subr.mxu0 0.0
        %1088 = vmatpush1.msra.mxu0 %v710
        %1089 = vmatprep.subr.mxu0 0.0
        %1090 = vmatpush1.msra.mxu0 %v711
        %1091 = vmatprep.subr.mxu0 0.0
        %1092 = vmatpush1.msra.mxu0 %v712
        %1093 = vmatprep.subr.mxu0 0.0
        %1094 = vmatpush1.msra.mxu0 %v713
        %1095 = vmatprep.subr.mxu0 0.0
        %1096 = vmatpush1.msra.mxu0 %v714
        %1097 = vmatprep.subr.mxu0 0.0
        %1098 = vmatpush1.msra.mxu0 %v715
        %1099 = vmatprep.subr.mxu0 0.0
        %1100 = vmatpush1.msra.mxu0 %v716
        %1101 = vmatprep.subr.mxu0 0.0
        %1102 = vmatpush1.msra.mxu0 %v717
        %1103 = vmatprep.subr.mxu0 0.0
        %1104 = vmatpush1.msra.mxu0 %v718
        %1105 = vmatprep.subr.mxu0 0.0
        %1106 = vmatpush1.msra.mxu0 %v719
        %1107 = vmatprep.subr.mxu0 0.0
        %1108 = vmatpush1.msra.mxu0 %v720
        %1109 = vmatprep.subr.mxu0 0.0
        %1110 = vmatpush1.msra.mxu0 %v721
        %1111 = vmatprep.subr.mxu0 0.0
        %1112 = vmatpush1.msra.mxu0 %v722
        %1113 = vmatprep.subr.mxu0 0.0
        %1114 = vmatpush1.msra.mxu0 %v723
        %1115 = vmatprep.subr.mxu0 0.0
        %1116 = vmatpush1.msra.mxu0 %v724
        %1117 = vmatprep.subr.mxu0 0.0
        %1118 = vmatpush1.msra.mxu0 %v725
        %1119 = vmatprep.subr.mxu0 0.0
        %1120 = vmatpush1.msra.mxu0 %v726
        %1121 = vmatprep.subr.mxu0 0.0
        %1122 = vmatpush1.msra.mxu0 %v727
        %1123 = vmatprep.subr.mxu0 0.0
        %1124 = vmatpush1.msra.mxu0 %v728
        %1125 = vmatprep.mubr.f32.mxu0 %v562
        %1126 = vmatmul.mubr.f32.gmra.mrb[0].mxu0 %v561
        %v1127 = vpop.f32.mrb[0].mxu0
        %v1128 = vadd.f32 %v1053, %v1127
        %v1129 = vpop.f32.mrb[0].mxu0
        %1130 = vmatprep.mubr.f32.mxu0 %v566
        %1131 = vmatmul.mubr.f32.gmra.mrb[0].mxu0 %v565
        %v1132 = vpop.f32.mrb[0].mxu0
        %v1133 = vadd.f32 %v1058, %v1132
        %v1134 = vpop.f32.mrb[0].mxu0
        %1135 = vdwg.mxu0
        %1136 = vmatprep.subr.mxu0 0.0
        %1137 = vmatpush1.msra.mxu0 %v729
        %1138 = vmatprep.subr.mxu0 0.0
        %1139 = vmatpush1.msra.mxu0 %v730
        %1140 = vmatprep.subr.mxu0 0.0
        %1141 = vmatpush1.msra.mxu0 %v731
        %1142 = vmatprep.subr.mxu0 0.0
        %1143 = vmatpush1.msra.mxu0 %v732
        %1144 = vmatprep.subr.mxu0 0.0
        %1145 = vmatpush1.msra.mxu0 %v733
        %1146 = vmatprep.subr.mxu0 0.0
        %1147 = vmatpush1.msra.mxu0 %v734
        %1148 = vmatprep.subr.mxu0 0.0
        %1149 = vmatpush1.msra.mxu0 %v735
        %1150 = vmatprep.subr.mxu0 0.0
        %1151 = vmatpush1.msra.mxu0 %v736
        %1152 = vmatprep.subr.mxu0 0.0
        %1153 = vmatpush1.msra.mxu0 %v737
        %1154 = vmatprep.subr.mxu0 0.0
        %1155 = vmatpush1.msra.mxu0 %v738
        %1156 = vmatprep.subr.mxu0 0.0
        %1157 = vmatpush1.msra.mxu0 %v739
        %1158 = vmatprep.subr.mxu0 0.0
        %1159 = vmatpush1.msra.mxu0 %v740
        %1160 = vmatprep.subr.mxu0 0.0
        %1161 = vmatpush1.msra.mxu0 %v741
        %1162 = vmatprep.subr.mxu0 0.0
        %1163 = vmatpush1.msra.mxu0 %v742
        %1164 = vmatprep.subr.mxu0 0.0
        %1165 = vmatpush1.msra.mxu0 %v743
        %1166 = vmatprep.subr.mxu0 0.0
        %1167 = vmatpush1.msra.mxu0 %v744
        %1168 = vmatprep.subr.mxu0 0.0
        %1169 = vmatpush1.msra.mxu0 %v745
        %1170 = vmatprep.subr.mxu0 0.0
        %1171 = vmatpush1.msra.mxu0 %v746
        %1172 = vmatprep.subr.mxu0 0.0
        %1173 = vmatpush1.msra.mxu0 %v747
        %1174 = vmatprep.subr.mxu0 0.0
        %1175 = vmatpush1.msra.mxu0 %v748
        %1176 = vmatprep.subr.mxu0 0.0
        %1177 = vmatpush1.msra.mxu0 %v749
        %1178 = vmatprep.subr.mxu0 0.0
        %1179 = vmatpush1.msra.mxu0 %v750
        %1180 = vmatprep.subr.mxu0 0.0
        %1181 = vmatpush1.msra.mxu0 %v751
        %1182 = vmatprep.subr.mxu0 0.0
        %1183 = vmatpush1.msra.mxu0 %v752
        %1184 = vmatprep.subr.mxu0 0.0
        %1185 = vmatpush1.msra.mxu0 %v753
        %1186 = vmatprep.subr.mxu0 0.0
        %1187 = vmatpush1.msra.mxu0 %v754
        %1188 = vmatprep.subr.mxu0 0.0
        %1189 = vmatpush1.msra.mxu0 %v755
        %1190 = vmatprep.subr.mxu0 0.0
        %1191 = vmatpush1.msra.mxu0 %v756
        %1192 = vmatprep.subr.mxu0 0.0
        %1193 = vmatpush1.msra.mxu0 %v757
        %1194 = vmatprep.subr.mxu0 0.0
        %1195 = vmatpush1.msra.mxu0 %v758
        %1196 = vmatprep.subr.mxu0 0.0
        %1197 = vmatpush1.msra.mxu0 %v759
        %1198 = vmatprep.subr.mxu0 0.0
        %1199 = vmatpush1.msra.mxu0 %v760
        %1200 = vmatprep.mubr.f32.mxu0 %v564
        %1201 = vmatmul.mubr.f32.gmra.mrb[0].mxu0 %v563
        %v1202 = vpop.f32.mrb[0].mxu0
        %v1203 = vadd.f32 %v1128, %v1202
        %v1204 = vpop.f32.mrb[0].mxu0
        %1205 = vmatprep.mubr.f32.mxu0 %v568
        %1206 = vmatmul.mubr.f32.gmra.mrb[0].mxu0 %v567
        %v1207 = vpop.f32.mrb[0].mxu0
        %v1208 = vadd.f32 %v1133, %v1207
        %v1209 = vpop.f32.mrb[0].mxu0
        %1210 = vdwg.mxu0
        %1211 = vst [vmem:[%s266] sm:$0xff] %v1203
        %1212 = vst [vmem:[%s266 + $0x8] sm:$0xff] %v1208
        %p1213 = scmp.lt.s32.totalorder %s18, 1
        %s1214 = scalar_select %p1213, %s18, 1
        %s1215 = smul.addr %s1214, 2
        %s1216 = smul.addr %s1215, 8
        %s1217 = scalar_lea.vmem %s6, %s1216
        // Predicated region
        $region49: #{dense_layer_forward.1} parent=43 // pred_check
          %p1218 = pneg %p167
        $region50: #{dense_layer_forward.1} parent=43 // pred_check_branch
          %1220 = sbr.rel (%p1218) target = $region52
        $region51: #{dense_layer_forward.1} parent=43 // pred_region
          _
        $region52: #{dense_layer_forward.1} parent=43 // pred_fallthru
          _
      $region44: #{dense_layer_forward.1} parent=5 // pred_fallthru
        _
      %p1221 = scmp.le.s32.totalorder 2, %s13
      // Predicated region
      $region53: #{dense_layer_forward.1} parent=5 // pred_check
        %p1222 = pneg %p1221
      $region54: #{dense_layer_forward.1} parent=5 // pred_check_branch
        %1224 = sbr.rel (%p1222) target = $region56
      $region55: #{dense_layer_forward.1} parent=5 // pred_region
        %s1225 = ssub.s32 %s13, 2
        // Predicated region
        $region57: #{dense_layer_forward.1} parent=55 // pred_check
          %p1226 = pneg %p173
        $region58: #{dense_layer_forward.1} parent=55 // pred_check_branch
          %1228 = sbr.rel (%p1226) target = $region60
        $region59: #{dense_layer_forward.1} parent=55 // pred_region
          %p1229 = scmp.lt.s32.totalorder %s19, 1
          %s1230 = scalar_select %p1229, %s19, 1
          %s1231 = smul.addr %s1230, 2
          %s1232 = smul.addr %s1231, 8
          %s1233 = scalar_lea.vmem %s6, %s1232
        $region60: #{dense_layer_forward.1} parent=55 // pred_fallthru
          _
      $region56: #{dense_layer_forward.1} parent=5 // pred_fallthru
        _
    $region6: #{dense_layer_forward.1} parent=1 // loop_footer
      %s17 = sadd.s32 1, %s13
    $region7: #{dense_layer_forward.1} parent=1 // loop_footer_branch
      %12 = sbr.rel target = $region3
    $region8: #{dense_layer_forward.1} parent=1 // loop_exit
      _
    %1234 = vsyncpa [#allocation3], 1
    %s1235 = scalar_lea.sflag [#allocation3], 1
    %1236 = vsyncpa %s1235, 1

</llo_original>
